<compile_context>
chip_gen: v7x
topology: tpu7x:2x2x1
jax: 0.10.0
libtpu: 0.0.40
codegen_flags: <defaults>
</compile_context>

<pallas_src>
import functools
import math

import jax
import jax.numpy as jnp
import numpy as np
from jax.experimental import pallas as pl
from jax.experimental.pallas import tpu as pltpu

# Module hyper-parameters (defaults of MultiSimilarityLoss.__init__)
POS_MARGIN = 0.9                 # sample_method is on
NEG_MARGIN = 0.1
EPOCH_NUM = 300
DYN_SCALE = EPOCH_NUM / 300.0    # == 1.0 (Dynamic_margin branch)

# Exponent arguments folded into quadratics of sim (two FMAs each):
#   pos: -2*(s-0.5) + DYN*(s-PM)^2  = DYN*s^2 + (-2 - 2*DYN*PM)*s + (1 + DYN*PM^2)
#   neg:  50*(s-0.5) + DYN*(NM-s)^2 = DYN*s^2 + (50 - 2*DYN*NM)*s + (-25 + DYN*NM^2)
POS_A = DYN_SCALE
POS_B = -2.0 - 2.0 * DYN_SCALE * POS_MARGIN
POS_C = 1.0 + DYN_SCALE * POS_MARGIN ** 2
NEG_A = DYN_SCALE
NEG_B = 50.0 - 2.0 * DYN_SCALE * NEG_MARGIN
NEG_C = -25.0 + DYN_SCALE * NEG_MARGIN ** 2

_NEG_BIG = -1e30   # exp(-1e30) underflows to exactly 0  (masked-out pairs)
_POS_BIG = 1e30    # "+inf" sentinel for min() over an empty positive set


def _ms_loss_kernel(x_ref, xt_ref, tcol_ref, trow_ref, out_ref,
                    pos_min_s, pos_sum_s, neg_sum_s, *,
                    n, last_tile, last_local):
    i = pl.program_id(0)          # row tile
    p = pl.program_id(1)          # sweep: 0 = pos-min, 1 = pos/neg sums
    k = pl.program_id(2)          # column tile
    nk = pl.num_programs(2)
    tm = x_ref.shape[0]
    tn = xt_ref.shape[1]

    # ---- per-row-tile init (first sweep, first column tile) ---------------
    @pl.when(jnp.logical_and(p == 0, k == 0))
    def _init():
        pos_min_s[...] = jnp.full(pos_min_s.shape, _POS_BIG, jnp.float32)
        pos_sum_s[...] = jnp.zeros(pos_sum_s.shape, jnp.float32)
        neg_sum_s[...] = jnp.zeros(neg_sum_s.shape, jnp.float32)
        out_ref[...] = jnp.zeros(out_ref.shape, jnp.float32)

    x = x_ref[...]                        # (TM, D)
    xt = xt_ref[...]                      # (D, TN) column tile of x.T
    t_col = tcol_ref[...]                 # (TM, 1) int32 labels of tile rows
    t_row = trow_ref[...]                 # (1, TN) int32 labels of tile cols

    # Gram-matrix block for this (row tile, col tile): plain matmul.
    sim = jnp.dot(x, xt, preferred_element_type=jnp.float32)     # (TM, TN)

    col_ids = k * tn + jax.lax.broadcasted_iota(jnp.int32, (1, tn), 1)
    valid_col = col_ids < n                                        # (1, TN)
    same = (t_col == t_row) & valid_col
    pos_mask = same & (sim < POS_MARGIN)     # pos_pair_ filter (< pos_margin)

    # ---- sweep 0: row-global running min over the positive pairs ----------
    @pl.when(p == 0)
    def _sweep_pos_min():
        blk_min = jnp.min(jnp.where(pos_mask, sim, _POS_BIG),
                          axis=1, keepdims=True)                  # (TM, 1)
        pos_min_s[...] = jnp.minimum(pos_min_s[...], blk_min)

    # ---- sweep 1: fused-exp pos/neg accumulation + finalize ----------------
    @pl.when(p == 1)
    def _sweep_sums():
        diff = (t_col != t_row) & valid_col
        # sample_method: neg + 0.5 > min(pos_pair_)  and  neg > neg_margin
        neg_mask = diff & (sim + 0.5 > pos_min_s[...]) & (sim > NEG_MARGIN)

        # Dynamic_margin exponents as quadratics of sim.  pos_mask / neg_mask
        # are mutually exclusive (same vs different labels), so a single exp
        # covers both; masks folded into the argument (exp(-1e30) == 0).
        sim2 = sim * sim
        pos_arg = POS_A * sim2 + POS_B * sim + POS_C
        neg_arg = NEG_A * sim2 + NEG_B * sim + NEG_C
        arg = jnp.where(pos_mask, pos_arg, jnp.where(neg_mask, neg_arg, _NEG_BIG))
        e = jnp.exp(arg)                                           # one EUP pass

        pos_sum_s[...] += jnp.sum(jnp.where(pos_mask, e, 0.0),
                                  axis=1, keepdims=True)           # (TM, 1)
        neg_sum_s[...] += jnp.sum(jnp.where(neg_mask, e, 0.0),
                                  axis=1, keepdims=True)           # (TM, 1)

        row8 = jax.lax.broadcasted_iota(jnp.int32, (8, 128), 0)
        lane = jax.lax.broadcasted_iota(jnp.int32, (1, 128), 1)

        # mean_pos_sim / mean_neg_sim come from the LAST torch loop iteration
        # (row n-1): accumulate its filtered-pair sums/counts into lanes 2..5
        # of the output block.  Only the row tile that owns row n-1 pays this.
        @pl.when(i == last_tile)
        def _last_row_stats():
            sim_l = sim[last_local:last_local + 1, :]              # (1, TN)
            pm_l = pos_mask[last_local:last_local + 1, :]
            nm_l = neg_mask[last_local:last_local + 1, :]
            vals = (jnp.where(lane == 2, jnp.sum(jnp.where(pm_l, sim_l, 0.0)), 0.0)
                    + jnp.where(lane == 3, jnp.sum(pm_l.astype(jnp.float32)), 0.0)
                    + jnp.where(lane == 4, jnp.sum(jnp.where(nm_l, sim_l, 0.0)), 0.0)
                    + jnp.where(lane == 5, jnp.sum(nm_l.astype(jnp.float32)), 0.0))
            out_ref[...] += jnp.where(row8 == 0,
                                      jnp.broadcast_to(vals, (8, 128)), 0.0)

        # finalize this row tile once the last column tile of sweep 1 is done
        @pl.when(k == nk - 1)
        def _finalize():
            row_ids = i * tm + jax.lax.broadcasted_iota(jnp.int32, (tm, 1), 0)
            valid_row = row_ids < n                                # (TM, 1)
            # Unmasked exps never underflow for bounded sims, so neg_sum > 0
            # <=> the row has surviving negatives (saves a count reduction).
            has_neg = neg_sum_s[...] > 0.0
            pos_loss = 0.5 * jnp.log(1.0 + pos_sum_s[...])
            neg_loss = (1.0 / 50.0) * jnp.log(1.0 + neg_sum_s[...])
            row_loss = jnp.where(has_neg & valid_row, pos_loss + neg_loss, 0.0)
            loss_part = jnp.sum(row_loss)                          # scalar
            c_part = jnp.sum(jnp.where(valid_row & jnp.logical_not(has_neg),
                                       1.0, 0.0))
            vals = (jnp.where(lane == 0, loss_part, 0.0)
                    + jnp.where(lane == 1, c_part, 0.0))
            out_ref[...] += jnp.where(row8 == 0,
                                      jnp.broadcast_to(vals, (8, 128)), 0.0)


def _vmem_cap_bytes():
    """Best-effort query of the local TPU's physical VMEM capacity."""
    try:
        info = pltpu.get_tpu_info()
        cap = getattr(info, "vmem_capacity_bytes", None)
        if cap:
            return int(cap)
    except Exception:
        pass
    return 64 << 20   # conservative default (v7x per-TensorCore VMEM)


def multi_similarity_loss(inputs, targets, nonorm=None, *, use_bf16_matmul=False):
    """Forward of MultiSimilarityLoss (default ctor args).
    Returns (loss, prec, mean_pos_sim, mean_neg_sim) like the torch module."""
    del nonorm  # unused by the torch forward as well
    x = jnp.asarray(inputs, jnp.float32)
    t = jnp.asarray(targets, jnp.int32)
    n, d = x.shape

    # Row tile: 256 feeds the 256-wide MXU of v6e/v7x with full tiles
    # (harmless on v5e); small batches just round up to the sublane granule.
    tm = 256 if n >= 256 else max(8, (-(-n // 8)) * 8)
    n_pad_r = -(-n // tm) * tm
    num_row_tiles = n_pad_r // tm

    # Column tile: bounds the per-step footprint to O(TM*TN + D*TN) so the
    # kernel never holds the whole (D, N) RHS / (TM, N) temporaries resident.
    if n > 512:
        tn = 512
        n_pad_c = -(-n // tn) * tn
    else:
        n_pad_c = n_pad_r          # single column tile covers everything
        tn = n_pad_c
    num_col_tiles = n_pad_c // tn

    x_r = x if n_pad_r == n else jnp.pad(x, ((0, n_pad_r - n), (0, 0)))
    x_c = x if n_pad_c == n else jnp.pad(x, ((0, n_pad_c - n), (0, 0)))
    t_r = t if n_pad_r == n else jnp.pad(t, (0, n_pad_r - n))
    t_c = t if n_pad_c == n else jnp.pad(t, (0, n_pad_c - n))

    lhs = x_r                              # (Np_r, D)
    rhs = x_c.T                            # (D, Np_c): lane-dense RHS (one XLA transpose)
    if use_bf16_matmul:
        # TODO(synk): bf16 sim error (~1e-3) is amplified by exp(50*s) in the
        # negative branch; only enable when relaxed accuracy is acceptable.
        lhs = lhs.astype(jnp.bfloat16)
        rhs = rhs.astype(jnp.bfloat16)
    t_col = t_r.reshape(n_pad_r, 1)
    t_row = t_c.reshape(1, n_pad_c)

    last_tile = (n - 1) // tm
    last_local = (n - 1) % tm

    # VMEM budget for this tile footprint, capped generation-aware.
    itemsize = 2 if use_bf16_matmul else 4
    need = (2 * tm * d * itemsize          # LHS row tile (double-buffered)
            + 2 * d * tn * itemsize        # RHS column tile (double-buffered)
            + 2 * (tm + 8) * 128 * 4       # label tiles (lane-padded)
            + 2 * 8 * 128 * 4              # output block
            + 3 * tm * 128 * 4             # per-row accumulator scratch
            + 10 * tm * tn * 4)            # in-flight (TM, TN) temporaries
    cap = _vmem_cap_bytes()
    vmem_limit = int(min(max(need + (4 << 20), 16 << 20), cap - (8 << 20)))

    kernel = functools.partial(_ms_loss_kernel, n=n,
                               last_tile=last_tile, last_local=last_local)

    parts = pl.pallas_call(
        kernel,
        out_shape=jax.ShapeDtypeStruct((num_row_tiles * 8, 128), jnp.float32),
        grid=(num_row_tiles, 2, num_col_tiles),
        in_specs=[
            pl.BlockSpec((tm, d), lambda i, p, k: (i, 0)),     # rows of x (this tile)
            pl.BlockSpec((d, tn), lambda i, p, k: (0, k)),     # column tile of x.T
            pl.BlockSpec((tm, 1), lambda i, p, k: (i, 0)),     # labels of tile rows
            pl.BlockSpec((1, tn), lambda i, p, k: (0, k)),     # labels of tile columns
        ],
        out_specs=pl.BlockSpec((8, 128), lambda i, p, k: (i, 0)),
        scratch_shapes=[
            pltpu.VMEM((tm, 1), jnp.float32),    # running min of positive sims
            pltpu.VMEM((tm, 1), jnp.float32),    # sum exp over positive pairs
            pltpu.VMEM((tm, 1), jnp.float32),    # sum exp over negative pairs
        ],
        compiler_params=pltpu.CompilerParams(
            dimension_semantics=("parallel", "arbitrary", "arbitrary"),
            vmem_limit_bytes=vmem_limit),
    )(lhs, rhs, t_col, t_row)

    # Non-first rows of each (8,128) block are zero; sum the per-tile partials.
    sums = jnp.sum(parts, axis=0)          # (128,)
    loss = sums[0] / n
    prec = sums[1] / n
    mean_pos_sim = sums[2] / sums[3]       # NaN for empty sets (== torch.mean([]))
    mean_neg_sim = sums[4] / sums[5]
    return loss, prec, mean_pos_sim, mean_neg_sim


def _reference(inputs, targets):
    """Pure-numpy mirror of the torch forward (with the same empty-pos sentinel)."""
    x32 = np.asarray(inputs, dtype=np.float32)
    t = np.asarray(targets)
    n = x32.shape[0]
    sim = (x32 @ x32.T).astype(np.float64)
    loss_sum, c = 0.0, 0
    mean_pos = mean_neg = float("nan")
    for i in range(n):
        row = sim[i]
        pos = row[(t == t[i]) & (row < POS_MARGIN)]
        neg = row[t != t[i]]
        pos_min = pos.min() if pos.size else _POS_BIG
        neg = neg[(neg + 0.5 > pos_min) & (neg > NEG_MARGIN)]
        pos_loss = 0.5 * np.log1p(np.sum(np.exp(
            -2.0 * (pos - 0.5) + DYN_SCALE * (pos - POS_MARGIN) ** 2)))
        neg_loss = (1.0 / 50.0) * np.log1p(np.sum(np.exp(
            50.0 * (neg - 0.5) + DYN_SCALE * (NEG_MARGIN - neg) ** 2)))
        if i == n - 1:
            mean_pos = float(pos.mean()) if pos.size else float("nan")
            mean_neg = float(neg.mean()) if neg.size else float("nan")
        if neg.size == 0:
            c += 1
            continue
        loss_sum += pos_loss + neg_loss
    return loss_sum / n, c / n, mean_pos, mean_neg


if __name__ == "__main__":
    key = jax.random.PRNGKey(0)
    n, d = 8, 32  # batch of 8 embeddings, hidden dim 32
    x = jax.random.normal(key, (n, d), dtype=jnp.float32)
    # L2-normalize like typical metric-learning embeddings (keeps exp(50*.) finite)
    x = x / jnp.linalg.norm(x, axis=1, keepdims=True)
    targets = jnp.array([0, 0, 1, 1, 2, 2, 3, 3], dtype=jnp.int32)

    outs = multi_similarity_loss(x, targets, nonorm=None)
    outs = jax.block_until_ready(outs)

    ref = _reference(np.asarray(x), np.asarray(targets))
    got = [float(v) for v in outs]
    for g, r in zip(got, ref):
        if math.isnan(r):
            assert math.isnan(g), (got, ref)
        else:
            assert abs(g - r) <= 2e-4 + 2e-4 * abs(r), (got, ref)
    print("KERNEL_OK")
</pallas_src>

<mosaic_0001>
module attributes {stable_mosaic.version = 11 : i64} {
  func.func @_ms_loss_kernel(%arg0: i32, %arg1: i32, %arg2: i32, %arg3: memref<8x32xf32, #tpu.memory_space<vmem>>, %arg4: memref<32x8xf32, #tpu.memory_space<vmem>>, %arg5: memref<8x1xi32, #tpu.memory_space<vmem>>, %arg6: memref<1x8xi32, #tpu.memory_space<vmem>>, %arg7: memref<8x128xf32, #tpu.memory_space<vmem>>, %arg8: memref<8x1xf32, #tpu.memory_space<vmem>>, %arg9: memref<8x1xf32, #tpu.memory_space<vmem>>, %arg10: memref<8x1xf32, #tpu.memory_space<vmem>>) attributes {dimension_semantics = [#tpu.dimension_semantics<parallel>, #tpu.dimension_semantics<arbitrary>, #tpu.dimension_semantics<arbitrary>], iteration_bounds = array<i64: 1, 2, 1>, scalar_prefetch = 0 : i64, scratch_operands = 3 : i64, tpu.core_type = #tpu.core_type<tc>, window_params = [{transform_indices = @transform_0, window_bounds = array<i64: 8, 32>}, {transform_indices = @transform_1, window_bounds = array<i64: 32, 8>}, {transform_indices = @transform_2, window_bounds = array<i64: 8, 1>}, {transform_indices = @transform_3, window_bounds = array<i64: 1, 8>}, {transform_indices = @transform_4, window_bounds = array<i64: 8, 128>}]} {
    %c0_i32 = arith.constant 0 : i32
    %0 = arith.cmpi eq, %arg1, %c0_i32 : i32
    %c0_i32_0 = arith.constant 0 : i32
    %1 = arith.cmpi eq, %arg2, %c0_i32_0 : i32
    %2 = arith.andi %0, %1 : i1
    %3 = arith.extui %2 : i1 to i32
    %c0_i32_1 = arith.constant 0 : i32
    %4 = arith.cmpi ne, %3, %c0_i32_1 : i32
    scf.if %4 {
      %cst_14 = arith.constant 1.000000e+30 : f32
      %30 = vector.broadcast %cst_14 : f32 to vector<8x1xf32>
      %c0_15 = arith.constant 0 : index
      %c0_16 = arith.constant 0 : index
      %31 = vector.load %arg8[%c0_15, %c0_16] : memref<8x1xf32, #tpu.memory_space<vmem>>, vector<8x1xf32>
      tpu.vector_store %arg8[%c0_15, %c0_16], %30 {strides = array<i32>} : memref<8x1xf32, #tpu.memory_space<vmem>>, vector<8x1xf32>,
      %cst_17 = arith.constant 0.000000e+00 : f32
      %32 = vector.broadcast %cst_17 : f32 to vector<8x1xf32>
      %c0_18 = arith.constant 0 : index
      %c0_19 = arith.constant 0 : index
      %33 = vector.load %arg9[%c0_18, %c0_19] : memref<8x1xf32, #tpu.memory_space<vmem>>, vector<8x1xf32>
      tpu.vector_store %arg9[%c0_18, %c0_19], %32 {strides = array<i32>} : memref<8x1xf32, #tpu.memory_space<vmem>>, vector<8x1xf32>,
      %cst_20 = arith.constant 0.000000e+00 : f32
      %34 = vector.broadcast %cst_20 : f32 to vector<8x1xf32>
      %c0_21 = arith.constant 0 : index
      %c0_22 = arith.constant 0 : index
      %35 = vector.load %arg10[%c0_21, %c0_22] : memref<8x1xf32, #tpu.memory_space<vmem>>, vector<8x1xf32>
      tpu.vector_store %arg10[%c0_21, %c0_22], %34 {strides = array<i32>} : memref<8x1xf32, #tpu.memory_space<vmem>>, vector<8x1xf32>,
      %cst_23 = arith.constant 0.000000e+00 : f32
      %36 = vector.broadcast %cst_23 : f32 to vector<8x128xf32>
      %c0_24 = arith.constant 0 : index
      %c0_25 = arith.constant 0 : index
      %37 = vector.load %arg7[%c0_24, %c0_25] : memref<8x128xf32, #tpu.memory_space<vmem>>, vector<8x128xf32>
      tpu.vector_store %arg7[%c0_24, %c0_25], %36 {strides = array<i32>} : memref<8x128xf32, #tpu.memory_space<vmem>>, vector<8x128xf32>,
    } else {
    }
    %c0 = arith.constant 0 : index
    %c0_2 = arith.constant 0 : index
    %5 = vector.load %arg3[%c0, %c0_2] : memref<8x32xf32, #tpu.memory_space<vmem>>, vector<8x32xf32>
    %c0_3 = arith.constant 0 : index
    %c0_4 = arith.constant 0 : index
    %6 = vector.load %arg4[%c0_3, %c0_4] : memref<32x8xf32, #tpu.memory_space<vmem>>, vector<32x8xf32>
    %c0_5 = arith.constant 0 : index
    %c0_6 = arith.constant 0 : index
    %7 = vector.load %arg5[%c0_5, %c0_6] : memref<8x1xi32, #tpu.memory_space<vmem>>, vector<8x1xi32>
    %c0_7 = arith.constant 0 : index
    %c0_8 = arith.constant 0 : index
    %8 = vector.load %arg6[%c0_7, %c0_8] : memref<1x8xi32, #tpu.memory_space<vmem>>, vector<1x8xi32>
    %cst = arith.constant dense<0.000000e+00> : vector<8x8xf32>
    %9 = tpu.matmul %5, %6, %cst {dimension_numbers = #tpu.dot_dimension_numbers<[1], [0], [0], [1], [0, 0, 1, 1], [], []>} : vector<8x32xf32>, vector<32x8xf32>, vector<8x8xf32> -> vector<8x8xf32>
    %c8_i32 = arith.constant 8 : i32
    %10 = arith.muli %arg2, %c8_i32 : i32
    %11 = tpu.iota {dimensions = array<i32: 1>} : vector<1x8xi32>
    %12 = vector.broadcast %10 : i32 to vector<1x8xi32>
    %13 = arith.addi %12, %11 : vector<1x8xi32>
    %c8_i32_9 = arith.constant 8 : i32
    %14 = vector.broadcast %c8_i32_9 : i32 to vector<1x8xi32>
    %15 = arith.cmpi slt, %13, %14 : vector<1x8xi32>
    %16 = vector.broadcast %7 : vector<8x1xi32> to vector<8x8xi32>
    %17 = vector.broadcast %8 : vector<1x8xi32> to vector<8x8xi32>
    %18 = arith.cmpi eq, %16, %17 : vector<8x8xi32>
    %19 = vector.broadcast %15 : vector<1x8xi1> to vector<8x8xi1>
    %20 = arith.andi %18, %19 : vector<8x8xi1>
    %cst_10 = arith.constant 0.899999976 : f32
    %21 = vector.broadcast %cst_10 : f32 to vector<8x8xf32>
    %22 = arith.cmpf olt, %9, %21 : vector<8x8xf32>
    %23 = arith.andi %20, %22 : vector<8x8xi1>
    %c0_i32_11 = arith.constant 0 : i32
    %24 = arith.cmpi eq, %arg1, %c0_i32_11 : i32
    %25 = arith.extui %24 : i1 to i32
    %c0_i32_12 = arith.constant 0 : i32
    %26 = arith.cmpi ne, %25, %c0_i32_12 : i32
    scf.if %26 {
      %cst_14 = arith.constant 1.000000e+30 : f32
      %30 = vector.broadcast %cst_14 : f32 to vector<8x8xf32>
      %31 = arith.select %23, %9, %30 : vector<8x8xi1>, vector<8x8xf32>
      %cst_15 = arith.constant dense<0x7F800000> : vector<8xf32>
      %32 = vector.multi_reduction <minimumf>, %31, %cst_15 [1] : vector<8x8xf32> to vector<8xf32>
      %33 = vector.shape_cast %32 : vector<8xf32> to vector<8x1xf32>
      %c0_16 = arith.constant 0 : index
      %c0_17 = arith.constant 0 : index
      %34 = vector.load %arg8[%c0_16, %c0_17] : memref<8x1xf32, #tpu.memory_space<vmem>>, vector<8x1xf32>
      %35 = arith.minimumf %34, %33 : vector<8x1xf32>
      %c0_18 = arith.constant 0 : index
      %c0_19 = arith.constant 0 : index
      %36 = vector.load %arg8[%c0_18, %c0_19] : memref<8x1xf32, #tpu.memory_space<vmem>>, vector<8x1xf32>
      tpu.vector_store %arg8[%c0_18, %c0_19], %35 {strides = array<i32>} : memref<8x1xf32, #tpu.memory_space<vmem>>, vector<8x1xf32>,
    } else {
    }
    %c1_i32 = arith.constant 1 : i32
    %27 = arith.cmpi eq, %arg1, %c1_i32 : i32
    %28 = arith.extui %27 : i1 to i32
    %c0_i32_13 = arith.constant 0 : i32
    %29 = arith.cmpi ne, %28, %c0_i32_13 : i32
    scf.if %29 {
      %30 = vector.broadcast %7 : vector<8x1xi32> to vector<8x8xi32>
      %31 = vector.broadcast %8 : vector<1x8xi32> to vector<8x8xi32>
      %32 = arith.cmpi ne, %30, %31 : vector<8x8xi32>
      %33 = vector.broadcast %15 : vector<1x8xi1> to vector<8x8xi1>
      %34 = arith.andi %32, %33 : vector<8x8xi1>
      %cst_14 = arith.constant 5.000000e-01 : f32
      %35 = vector.broadcast %cst_14 : f32 to vector<8x8xf32>
      %36 = arith.addf %9, %35 : vector<8x8xf32>
      %c0_15 = arith.constant 0 : index
      %c0_16 = arith.constant 0 : index
      %37 = vector.load %arg8[%c0_15, %c0_16] : memref<8x1xf32, #tpu.memory_space<vmem>>, vector<8x1xf32>
      %38 = vector.broadcast %37 : vector<8x1xf32> to vector<8x8xf32>
      %39 = arith.cmpf ogt, %36, %38 : vector<8x8xf32>
      %40 = arith.andi %34, %39 : vector<8x8xi1>
      %cst_17 = arith.constant 1.000000e-01 : f32
      %41 = vector.broadcast %cst_17 : f32 to vector<8x8xf32>
      %42 = arith.cmpf ogt, %9, %41 : vector<8x8xf32>
      %43 = arith.andi %40, %42 : vector<8x8xi1>
      %44 = arith.mulf %9, %9 : vector<8x8xf32>
      %cst_18 = arith.constant 1.000000e+00 : f32
      %45 = vector.broadcast %cst_18 : f32 to vector<8x8xf32>
      %46 = arith.mulf %45, %44 : vector<8x8xf32>
      %cst_19 = arith.constant -3.800000e+00 : f32
      %47 = vector.broadcast %cst_19 : f32 to vector<8x8xf32>
      %48 = arith.mulf %47, %9 : vector<8x8xf32>
      %49 = arith.addf %46, %48 : vector<8x8xf32>
      %cst_20 = arith.constant 1.810000e+00 : f32
      %50 = vector.broadcast %cst_20 : f32 to vector<8x8xf32>
      %51 = arith.addf %49, %50 : vector<8x8xf32>
      %cst_21 = arith.constant 1.000000e+00 : f32
      %52 = vector.broadcast %cst_21 : f32 to vector<8x8xf32>
      %53 = arith.mulf %52, %44 : vector<8x8xf32>
      %cst_22 = arith.constant 4.980000e+01 : f32
      %54 = vector.broadcast %cst_22 : f32 to vector<8x8xf32>
      %55 = arith.mulf %54, %9 : vector<8x8xf32>
      %56 = arith.addf %53, %55 : vector<8x8xf32>
      %cst_23 = arith.constant -2.499000e+01 : f32
      %57 = vector.broadcast %cst_23 : f32 to vector<8x8xf32>
      %58 = arith.addf %56, %57 : vector<8x8xf32>
      %cst_24 = arith.constant -1.000000e+30 : f32
      %59 = vector.broadcast %cst_24 : f32 to vector<8x8xf32>
      %60 = arith.select %43, %58, %59 : vector<8x8xi1>, vector<8x8xf32>
      %61 = arith.select %23, %51, %60 : vector<8x8xi1>, vector<8x8xf32>
      %62 = math.exp %61 : vector<8x8xf32>
      %c0_25 = arith.constant 0 : index
      %c0_26 = arith.constant 0 : index
      %63 = vector.load %arg9[%c0_25, %c0_26] : memref<8x1xf32, #tpu.memory_space<vmem>>, vector<8x1xf32>
      %cst_27 = arith.constant 0.000000e+00 : f32
      %64 = vector.broadcast %cst_27 : f32 to vector<8x8xf32>
      %65 = arith.select %23, %62, %64 : vector<8x8xi1>, vector<8x8xf32>
      %cst_28 = arith.constant dense<0.000000e+00> : vector<8xf32>
      %66 = vector.multi_reduction <add>, %65, %cst_28 [1] : vector<8x8xf32> to vector<8xf32>
      %67 = vector.shape_cast %66 : vector<8xf32> to vector<8x1xf32>
      %68 = arith.addf %63, %67 : vector<8x1xf32>
      %c0_29 = arith.constant 0 : index
      %c0_30 = arith.constant 0 : index
      %69 = vector.load %arg9[%c0_29, %c0_30] : memref<8x1xf32, #tpu.memory_space<vmem>>, vector<8x1xf32>
      tpu.vector_store %arg9[%c0_29, %c0_30], %68 {strides = array<i32>} : memref<8x1xf32, #tpu.memory_space<vmem>>, vector<8x1xf32>,
      %c0_31 = arith.constant 0 : index
      %c0_32 = arith.constant 0 : index
      %70 = vector.load %arg10[%c0_31, %c0_32] : memref<8x1xf32, #tpu.memory_space<vmem>>, vector<8x1xf32>
      %cst_33 = arith.constant 0.000000e+00 : f32
      %71 = vector.broadcast %cst_33 : f32 to vector<8x8xf32>
      %72 = arith.select %43, %62, %71 : vector<8x8xi1>, vector<8x8xf32>
      %cst_34 = arith.constant dense<0.000000e+00> : vector<8xf32>
      %73 = vector.multi_reduction <add>, %72, %cst_34 [1] : vector<8x8xf32> to vector<8xf32>
      %74 = vector.shape_cast %73 : vector<8xf32> to vector<8x1xf32>
      %75 = arith.addf %70, %74 : vector<8x1xf32>
      %c0_35 = arith.constant 0 : index
      %c0_36 = arith.constant 0 : index
      %76 = vector.load %arg10[%c0_35, %c0_36] : memref<8x1xf32, #tpu.memory_space<vmem>>, vector<8x1xf32>
      tpu.vector_store %arg10[%c0_35, %c0_36], %75 {strides = array<i32>} : memref<8x1xf32, #tpu.memory_space<vmem>>, vector<8x1xf32>,
      %77 = tpu.iota {dimensions = array<i32: 0>} : vector<8x128xi32>
      %78 = tpu.iota {dimensions = array<i32: 1>} : vector<1x128xi32>
      %c0_i32_37 = arith.constant 0 : i32
      %79 = arith.cmpi eq, %arg0, %c0_i32_37 : i32
      %80 = arith.extui %79 : i1 to i32
      %c0_i32_38 = arith.constant 0 : i32
      %81 = arith.cmpi ne, %80, %c0_i32_38 : i32
      scf.if %81 {
        %85 = vector.extract_strided_slice %9 {offsets = [7, 0], sizes = [1, 8], strides = [1, 1]} : vector<8x8xf32> to vector<1x8xf32>
        %86 = vector.extract_strided_slice %23 {offsets = [7, 0], sizes = [1, 8], strides = [1, 1]} : vector<8x8xi1> to vector<1x8xi1>
        %87 = vector.extract_strided_slice %43 {offsets = [7, 0], sizes = [1, 8], strides = [1, 1]} : vector<8x8xi1> to vector<1x8xi1>
        %c2_i32 = arith.constant 2 : i32
        %88 = vector.broadcast %c2_i32 : i32 to vector<1x128xi32>
        %89 = arith.cmpi eq, %78, %88 : vector<1x128xi32>
        %cst_41 = arith.constant 0.000000e+00 : f32
        %90 = vector.broadcast %cst_41 : f32 to vector<1x8xf32>
        %91 = arith.select %86, %85, %90 : vector<1x8xi1>, vector<1x8xf32>
        %92 = vector.shape_cast %91 : vector<1x8xf32> to vector<1x1x8xf32>
        %cst_42 = arith.constant dense<0.000000e+00> : vector<1xf32>
        %93 = vector.multi_reduction <add>, %92, %cst_42 [1, 2] : vector<1x1x8xf32> to vector<1xf32>
        %94 = vector.shape_cast %93 : vector<1xf32> to vector<1x1x1xf32>
        %95 = vector.extract %94[0, 0, 0] : f32 from vector<1x1x1xf32>
        %cst_43 = arith.constant 0.000000e+00 : f32
        %96 = vector.broadcast %95 : f32 to vector<1x128xf32>
        %97 = vector.broadcast %cst_43 : f32 to vector<1x128xf32>
        %98 = arith.select %89, %96, %97 : vector<1x128xi1>, vector<1x128xf32>
        %c3_i32 = arith.constant 3 : i32
        %99 = vector.broadcast %c3_i32 : i32 to vector<1x128xi32>
        %100 = arith.cmpi eq, %78, %99 : vector<1x128xi32>
        %101 = arith.extui %86 : vector<1x8xi1> to vector<1x8xi32>
        %102 = arith.sitofp %101 : vector<1x8xi32> to vector<1x8xf32>
        %103 = vector.shape_cast %102 : vector<1x8xf32> to vector<1x1x8xf32>
        %cst_44 = arith.constant dense<0.000000e+00> : vector<1xf32>
        %104 = vector.multi_reduction <add>, %103, %cst_44 [1, 2] : vector<1x1x8xf32> to vector<1xf32>
        %105 = vector.shape_cast %104 : vector<1xf32> to vector<1x1x1xf32>
        %106 = vector.extract %105[0, 0, 0] : f32 from vector<1x1x1xf32>
        %cst_45 = arith.constant 0.000000e+00 : f32
        %107 = vector.broadcast %106 : f32 to vector<1x128xf32>
        %108 = vector.broadcast %cst_45 : f32 to vector<1x128xf32>
        %109 = arith.select %100, %107, %108 : vector<1x128xi1>, vector<1x128xf32>
        %110 = arith.addf %98, %109 : vector<1x128xf32>
        %c4_i32 = arith.constant 4 : i32
        %111 = vector.broadcast %c4_i32 : i32 to vector<1x128xi32>
        %112 = arith.cmpi eq, %78, %111 : vector<1x128xi32>
        %cst_46 = arith.constant 0.000000e+00 : f32
        %113 = vector.broadcast %cst_46 : f32 to vector<1x8xf32>
        %114 = arith.select %87, %85, %113 : vector<1x8xi1>, vector<1x8xf32>
        %115 = vector.shape_cast %114 : vector<1x8xf32> to vector<1x1x8xf32>
        %cst_47 = arith.constant dense<0.000000e+00> : vector<1xf32>
        %116 = vector.multi_reduction <add>, %115, %cst_47 [1, 2] : vector<1x1x8xf32> to vector<1xf32>
        %117 = vector.shape_cast %116 : vector<1xf32> to vector<1x1x1xf32>
        %118 = vector.extract %117[0, 0, 0] : f32 from vector<1x1x1xf32>
        %cst_48 = arith.constant 0.000000e+00 : f32
        %119 = vector.broadcast %118 : f32 to vector<1x128xf32>
        %120 = vector.broadcast %cst_48 : f32 to vector<1x128xf32>
        %121 = arith.select %112, %119, %120 : vector<1x128xi1>, vector<1x128xf32>
        %122 = arith.addf %110, %121 : vector<1x128xf32>
        %c5_i32 = arith.constant 5 : i32
        %123 = vector.broadcast %c5_i32 : i32 to vector<1x128xi32>
        %124 = arith.cmpi eq, %78, %123 : vector<1x128xi32>
        %125 = arith.extui %87 : vector<1x8xi1> to vector<1x8xi32>
        %126 = arith.sitofp %125 : vector<1x8xi32> to vector<1x8xf32>
        %127 = vector.shape_cast %126 : vector<1x8xf32> to vector<1x1x8xf32>
        %cst_49 = arith.constant dense<0.000000e+00> : vector<1xf32>
        %128 = vector.multi_reduction <add>, %127, %cst_49 [1, 2] : vector<1x1x8xf32> to vector<1xf32>
        %129 = vector.shape_cast %128 : vector<1xf32> to vector<1x1x1xf32>
        %130 = vector.extract %129[0, 0, 0] : f32 from vector<1x1x1xf32>
        %cst_50 = arith.constant 0.000000e+00 : f32
        %131 = vector.broadcast %130 : f32 to vector<1x128xf32>
        %132 = vector.broadcast %cst_50 : f32 to vector<1x128xf32>
        %133 = arith.select %124, %131, %132 : vector<1x128xi1>, vector<1x128xf32>
        %134 = arith.addf %122, %133 : vector<1x128xf32>
        %c0_51 = arith.constant 0 : index
        %c0_52 = arith.constant 0 : index
        %135 = vector.load %arg7[%c0_51, %c0_52] : memref<8x128xf32, #tpu.memory_space<vmem>>, vector<8x128xf32>
        %c0_i32_53 = arith.constant 0 : i32
        %136 = vector.broadcast %c0_i32_53 : i32 to vector<8x128xi32>
        %137 = arith.cmpi eq, %77, %136 : vector<8x128xi32>
        %138 = vector.shape_cast %134 : vector<1x128xf32> to vector<1x128xf32>
        %139 = vector.broadcast %138 : vector<1x128xf32> to vector<8x128xf32>
        %cst_54 = arith.constant 0.000000e+00 : f32
        %140 = vector.broadcast %cst_54 : f32 to vector<8x128xf32>
        %141 = arith.select %137, %139, %140 : vector<8x128xi1>, vector<8x128xf32>
        %142 = arith.addf %135, %141 : vector<8x128xf32>
        %c0_55 = arith.constant 0 : index
        %c0_56 = arith.constant 0 : index
        %143 = vector.load %arg7[%c0_55, %c0_56] : memref<8x128xf32, #tpu.memory_space<vmem>>, vector<8x128xf32>
        tpu.vector_store %arg7[%c0_55, %c0_56], %142 {strides = array<i32>} : memref<8x128xf32, #tpu.memory_space<vmem>>, vector<8x128xf32>,
      } else {
      }
      %c0_i32_39 = arith.constant 0 : i32
      %82 = arith.cmpi eq, %arg2, %c0_i32_39 : i32
      %83 = arith.extui %82 : i1 to i32
      %c0_i32_40 = arith.constant 0 : i32
      %84 = arith.cmpi ne, %83, %c0_i32_40 : i32
      scf.if %84 {
        %c8_i32_41 = arith.constant 8 : i32
        %85 = arith.muli %arg0, %c8_i32_41 : i32
        %86 = tpu.iota {dimensions = array<i32: 0>} : vector<8x1xi32>
        %87 = vector.broadcast %85 : i32 to vector<8x1xi32>
        %88 = arith.addi %87, %86 : vector<8x1xi32>
        %c8_i32_42 = arith.constant 8 : i32
        %89 = vector.broadcast %c8_i32_42 : i32 to vector<8x1xi32>
        %90 = arith.cmpi slt, %88, %89 : vector<8x1xi32>
        %c0_43 = arith.constant 0 : index
        %c0_44 = arith.constant 0 : index
        %91 = vector.load %arg10[%c0_43, %c0_44] : memref<8x1xf32, #tpu.memory_space<vmem>>, vector<8x1xf32>
        %cst_45 = arith.constant 0.000000e+00 : f32
        %92 = vector.broadcast %cst_45 : f32 to vector<8x1xf32>
        %93 = arith.cmpf ogt, %91, %92 : vector<8x1xf32>
        %c0_46 = arith.constant 0 : index
        %c0_47 = arith.constant 0 : index
        %94 = vector.load %arg9[%c0_46, %c0_47] : memref<8x1xf32, #tpu.memory_space<vmem>>, vector<8x1xf32>
        %cst_48 = arith.constant 1.000000e+00 : f32
        %95 = vector.broadcast %cst_48 : f32 to vector<8x1xf32>
        %96 = arith.addf %95, %94 : vector<8x1xf32>
        %97 = math.log %96 : vector<8x1xf32>
        %cst_49 = arith.constant 5.000000e-01 : f32
        %98 = vector.broadcast %cst_49 : f32 to vector<8x1xf32>
        %99 = arith.mulf %98, %97 : vector<8x1xf32>
        %c0_50 = arith.constant 0 : index
        %c0_51 = arith.constant 0 : index
        %100 = vector.load %arg10[%c0_50, %c0_51] : memref<8x1xf32, #tpu.memory_space<vmem>>, vector<8x1xf32>
        %cst_52 = arith.constant 1.000000e+00 : f32
        %101 = vector.broadcast %cst_52 : f32 to vector<8x1xf32>
        %102 = arith.addf %101, %100 : vector<8x1xf32>
        %103 = math.log %102 : vector<8x1xf32>
        %cst_53 = arith.constant 2.000000e-02 : f32
        %104 = vector.broadcast %cst_53 : f32 to vector<8x1xf32>
        %105 = arith.mulf %104, %103 : vector<8x1xf32>
        %106 = arith.andi %93, %90 : vector<8x1xi1>
        %107 = arith.addf %99, %105 : vector<8x1xf32>
        %cst_54 = arith.constant 0.000000e+00 : f32
        %108 = vector.broadcast %cst_54 : f32 to vector<8x1xf32>
        %109 = arith.select %106, %107, %108 : vector<8x1xi1>, vector<8x1xf32>
        %110 = vector.shape_cast %109 : vector<8x1xf32> to vector<1x8x1xf32>
        %cst_55 = arith.constant dense<0.000000e+00> : vector<1xf32>
        %111 = vector.multi_reduction <add>, %110, %cst_55 [1, 2] : vector<1x8x1xf32> to vector<1xf32>
        %112 = vector.shape_cast %111 : vector<1xf32> to vector<1x1x1xf32>
        %113 = vector.extract %112[0, 0, 0] : f32 from vector<1x1x1xf32>
        %cst_56 = arith.constant dense<true> : vector<8x1xi1>
        %114 = arith.xori %93, %cst_56 : vector<8x1xi1>
        %115 = arith.andi %90, %114 : vector<8x1xi1>
        %cst_57 = arith.constant 1.000000e+00 : f32
        %cst_58 = arith.constant 0.000000e+00 : f32
        %116 = vector.broadcast %cst_57 : f32 to vector<8x1xf32>
        %117 = vector.broadcast %cst_58 : f32 to vector<8x1xf32>
        %118 = arith.select %115, %116, %117 : vector<8x1xi1>, vector<8x1xf32>
        %119 = vector.shape_cast %118 : vector<8x1xf32> to vector<1x8x1xf32>
        %cst_59 = arith.constant dense<0.000000e+00> : vector<1xf32>
        %120 = vector.multi_reduction <add>, %119, %cst_59 [1, 2] : vector<1x8x1xf32> to vector<1xf32>
        %121 = vector.shape_cast %120 : vector<1xf32> to vector<1x1x1xf32>
        %122 = vector.extract %121[0, 0, 0] : f32 from vector<1x1x1xf32>
        %c0_i32_60 = arith.constant 0 : i32
        %123 = vector.broadcast %c0_i32_60 : i32 to vector<1x128xi32>
        %124 = arith.cmpi eq, %78, %123 : vector<1x128xi32>
        %cst_61 = arith.constant 0.000000e+00 : f32
        %125 = vector.broadcast %113 : f32 to vector<1x128xf32>
        %126 = vector.broadcast %cst_61 : f32 to vector<1x128xf32>
        %127 = arith.select %124, %125, %126 : vector<1x128xi1>, vector<1x128xf32>
        %c1_i32_62 = arith.constant 1 : i32
        %128 = vector.broadcast %c1_i32_62 : i32 to vector<1x128xi32>
        %129 = arith.cmpi eq, %78, %128 : vector<1x128xi32>
        %cst_63 = arith.constant 0.000000e+00 : f32
        %130 = vector.broadcast %122 : f32 to vector<1x128xf32>
        %131 = vector.broadcast %cst_63 : f32 to vector<1x128xf32>
        %132 = arith.select %129, %130, %131 : vector<1x128xi1>, vector<1x128xf32>
        %133 = arith.addf %127, %132 : vector<1x128xf32>
        %c0_64 = arith.constant 0 : index
        %c0_65 = arith.constant 0 : index
        %134 = vector.load %arg7[%c0_64, %c0_65] : memref<8x128xf32, #tpu.memory_space<vmem>>, vector<8x128xf32>
        %c0_i32_66 = arith.constant 0 : i32
        %135 = vector.broadcast %c0_i32_66 : i32 to vector<8x128xi32>
        %136 = arith.cmpi eq, %77, %135 : vector<8x128xi32>
        %137 = vector.shape_cast %133 : vector<1x128xf32> to vector<1x128xf32>
        %138 = vector.broadcast %137 : vector<1x128xf32> to vector<8x128xf32>
        %cst_67 = arith.constant 0.000000e+00 : f32
        %139 = vector.broadcast %cst_67 : f32 to vector<8x128xf32>
        %140 = arith.select %136, %138, %139 : vector<8x128xi1>, vector<8x128xf32>
        %141 = arith.addf %134, %140 : vector<8x128xf32>
        %c0_68 = arith.constant 0 : index
        %c0_69 = arith.constant 0 : index
        %142 = vector.load %arg7[%c0_68, %c0_69] : memref<8x128xf32, #tpu.memory_space<vmem>>, vector<8x128xf32>
        tpu.vector_store %arg7[%c0_68, %c0_69], %141 {strides = array<i32>} : memref<8x128xf32, #tpu.memory_space<vmem>>, vector<8x128xf32>,
      } else {
      }
    } else {
    }
    return
  }
  func.func @transform_0(%arg0: i32, %arg1: i32, %arg2: i32) -> (i32, i32) {
    %c0_i32 = arith.constant 0 : i32
    %c0_i32_0 = arith.constant 0 : i32
    return %arg0, %c0_i32 : i32, i32
  }
  func.func @transform_1(%arg0: i32, %arg1: i32, %arg2: i32) -> (i32, i32) {
    %c0_i32 = arith.constant 0 : i32
    %c0_i32_0 = arith.constant 0 : i32
    return %c0_i32, %arg2 : i32, i32
  }
  func.func @transform_2(%arg0: i32, %arg1: i32, %arg2: i32) -> (i32, i32) {
    %c0_i32 = arith.constant 0 : i32
    %c0_i32_0 = arith.constant 0 : i32
    return %arg0, %c0_i32 : i32, i32
  }
  func.func @transform_3(%arg0: i32, %arg1: i32, %arg2: i32) -> (i32, i32) {
    %c0_i32 = arith.constant 0 : i32
    %c0_i32_0 = arith.constant 0 : i32
    return %c0_i32, %arg2 : i32, i32
  }
  func.func @transform_4(%arg0: i32, %arg1: i32, %arg2: i32) -> (i32, i32) {
    %c0_i32 = arith.constant 0 : i32
    %c0_i32_0 = arith.constant 0 : i32
    return %arg0, %c0_i32 : i32, i32
  }
}

</mosaic_0001>

<llo_original>
// kernel: tpu_custom_call.1
$region0: #{tpu_custom_call.1}
  #allocation0 [shape = 'u32[]', space=smem, size = 0x4, offset = 0x4, fixed_abs, tag = 'smem constant byte address 0x4 - core index']
  #allocation1 [shape = 'u32[144,128]{1,0:T(1,128)}', space=vmem, size = 0x12000, scoped, tag = 'internal scratch']
  #allocation2 [shape = 'f32[8,1]{1,0:T(8,128)}', space=vmem, size = 0x1000, scoped, tag = 'scratch operand']
  #allocation3 [shape = 'f32[8,1]{1,0:T(8,128)}', space=vmem, size = 0x1000, scoped, tag = 'scratch operand']
  #allocation4 [shape = 'f32[8,1]{1,0:T(8,128)}', space=vmem, size = 0x1000, scoped, tag = 'scratch operand']
  %s0 = inlined_call_operand.vmem [shape: f32[8,32], index: 0, kind: input, shape index: {}]
  %s1 = inlined_call_operand.vmem [shape: f32[32,8], index: 1, kind: input, shape index: {}]
  %s2 = inlined_call_operand.vmem [shape: s32[8,1], index: 2, kind: input, shape index: {}]
  %s3 = inlined_call_operand.vmem [shape: s32[1,8], index: 3, kind: input, shape index: {}]
  %s4 = inlined_call_operand.hbm [shape: f32[8,128], index: 4, kind: output, shape index: {}]
  %s5 = sld [smem:[#allocation0]]
  $region69: #{tpu_custom_call.1} parent=0
    _
  %s7 = ssub.s32 1, %s5
  %s8 = scalar_select 0, %s7, %s5
  $region1: #{tpu_custom_call.1} parent=0
    #allocation5 [shape = 'u8[4096]{0}', space=vmem, size = 0x1000, scoped, tag = 'output window, operand 0, single buffered']
    #allocation6 [shape = 's32[2]{0}', space=sflag, size = 0x8, scoped, tag = 'scoped memory for tpu_custom_call.1']
    %9 = vsyncpa [#allocation6], 0
    loop: start=0, step=1, limit=4
    $region2: #{tpu_custom_call.1} parent=1 // loop_pre_header
      _
    $region3: #{tpu_custom_call.1} parent=1 // loop_header
      %s11 = sphi 0, %s15
      %p12 = scmp.ge.s32.totalorder %s11, 4
      %s18 = sphi 0, %s37
      %s19 = sphi 0, %s33
      %s20 = sphi 0, %s29
      %s21 = sphi 0, %s18
      %s22 = sphi 0, %s19
      %s23 = sphi 0, %s20
      %s24 = sphi 0, %s21
      %s25 = sphi 0, %s22
      %s26 = sphi 0, %s23
      %s40 = sphi 0, %s42
      %s43 = sphi 0, %s40
      %s44 = sphi 0, %s43
      %s60 = sphi 0, %s44
      %s66 = sphi 0, %s68
      %s69 = sphi 0, %s66
      %s70 = sphi 0, %s69
      %s86 = sphi 0, %s70
      %s92 = sphi 0, %s94
      %s95 = sphi 0, %s92
      %s96 = sphi 0, %s95
      %s112 = sphi 0, %s96
      %s118 = sphi 0, %s120
      %s121 = sphi 0, %s118
      %s122 = sphi 0, %s121
      %s138 = sphi 0, %s122
      %s144 = sphi 0, %s146
      %s147 = sphi 0, %s144
      %s148 = sphi 0, %s147
      %s164 = sphi 0, %s148
    $region4: #{tpu_custom_call.1} parent=1 // loop_header_branch
      %14 = sbr.rel (%p12) target = $region8
    $region5: #{tpu_custom_call.1} parent=1 // loop_body
      %s16 = ssub.s32 %s11, 1
      %s17 = ssub.s32 %s11, 2
      %s27 = sadd.s32 1, %s20
      %p28 = scmp.ge.s32.totalorder %s27, 1
      %s29 = scalar_select %p28, 0, %s27
      %s30 = sadd.s32 1, %s19
      %s31 = scalar_select %p28, %s30, %s19
      %p32 = scmp.ge.s32.totalorder %s31, 2
      %s33 = scalar_select %p32, 0, %s31
      %s34 = sadd.s32 1, %s18
      %s35 = scalar_select %p32, %s34, %s18
      %p36 = scmp.ge.s32.totalorder %s35, 1
      %s37 = scalar_select %p36, 0, %s35
      %s38 = ssub.s32 %s18, %s37
      %p39 = scmp.eq.s32.totalorder %s38, 0
      %s41 = sadd.s32 %s40, 1
      %s42 = scalar_select %p39, %s40, %s41
      %p45 = pneg %p39
      %p46 = scmp.eq.s32.totalorder %s11, 1
      %p47 = por %p45, %p46
      %p48 = scmp.ne.s32.totalorder %s40, %s43
      %p49 = scmp.eq.s32.totalorder %s11, 0
      %p50 = por %p48, %p49
      %p51 = scmp.ne.s32.totalorder %s40, %s43
      %p52 = scmp.eq.s32.totalorder %s16, 1
      %p53 = por %p51, %p52
      %p54 = scmp.ne.s32.totalorder %s43, %s44
      %p55 = scmp.eq.s32.totalorder %s16, 0
      %p56 = por %p54, %p55
      %p57 = scmp.ne.s32.totalorder %s43, %s44
      %p58 = scmp.eq.s32.totalorder %s17, 1
      %p59 = por %p57, %p58
      %p61 = scmp.ne.s32.totalorder %s44, %s60
      %p62 = scmp.eq.s32.totalorder %s17, 0
      %p63 = por %p61, %p62
      %s64 = ssub.s32 %s20, %s29
      %p65 = scmp.eq.s32.totalorder %s64, 0
      %s67 = sadd.s32 %s66, 1
      %s68 = scalar_select %p65, %s66, %s67
      %p71 = pneg %p65
      %p72 = scmp.eq.s32.totalorder %s11, 1
      %p73 = por %p71, %p72
      %p74 = scmp.ne.s32.totalorder %s66, %s69
      %p75 = scmp.eq.s32.totalorder %s11, 0
      %p76 = por %p74, %p75
      %p77 = scmp.ne.s32.totalorder %s66, %s69
      %p78 = scmp.eq.s32.totalorder %s16, 1
      %p79 = por %p77, %p78
      %p80 = scmp.ne.s32.totalorder %s69, %s70
      %p81 = scmp.eq.s32.totalorder %s16, 0
      %p82 = por %p80, %p81
      %p83 = scmp.ne.s32.totalorder %s69, %s70
      %p84 = scmp.eq.s32.totalorder %s17, 1
      %p85 = por %p83, %p84
      %p87 = scmp.ne.s32.totalorder %s70, %s86
      %p88 = scmp.eq.s32.totalorder %s17, 0
      %p89 = por %p87, %p88
      %s90 = ssub.s32 %s18, %s37
      %p91 = scmp.eq.s32.totalorder %s90, 0
      %s93 = sadd.s32 %s92, 1
      %s94 = scalar_select %p91, %s92, %s93
      %p97 = pneg %p91
      %p98 = scmp.eq.s32.totalorder %s11, 1
      %p99 = por %p97, %p98
      %p100 = scmp.ne.s32.totalorder %s92, %s95
      %p101 = scmp.eq.s32.totalorder %s11, 0
      %p102 = por %p100, %p101
      %p103 = scmp.ne.s32.totalorder %s92, %s95
      %p104 = scmp.eq.s32.totalorder %s16, 1
      %p105 = por %p103, %p104
      %p106 = scmp.ne.s32.totalorder %s95, %s96
      %p107 = scmp.eq.s32.totalorder %s16, 0
      %p108 = por %p106, %p107
      %p109 = scmp.ne.s32.totalorder %s95, %s96
      %p110 = scmp.eq.s32.totalorder %s17, 1
      %p111 = por %p109, %p110
      %p113 = scmp.ne.s32.totalorder %s96, %s112
      %p114 = scmp.eq.s32.totalorder %s17, 0
      %p115 = por %p113, %p114
      %s116 = ssub.s32 %s20, %s29
      %p117 = scmp.eq.s32.totalorder %s116, 0
      %s119 = sadd.s32 %s118, 1
      %s120 = scalar_select %p117, %s118, %s119
      %p123 = pneg %p117
      %p124 = scmp.eq.s32.totalorder %s11, 1
      %p125 = por %p123, %p124
      %p126 = scmp.ne.s32.totalorder %s118, %s121
      %p127 = scmp.eq.s32.totalorder %s11, 0
      %p128 = por %p126, %p127
      %p129 = scmp.ne.s32.totalorder %s118, %s121
      %p130 = scmp.eq.s32.totalorder %s16, 1
      %p131 = por %p129, %p130
      %p132 = scmp.ne.s32.totalorder %s121, %s122
      %p133 = scmp.eq.s32.totalorder %s16, 0
      %p134 = por %p132, %p133
      %p135 = scmp.ne.s32.totalorder %s121, %s122
      %p136 = scmp.eq.s32.totalorder %s17, 1
      %p137 = por %p135, %p136
      %p139 = scmp.ne.s32.totalorder %s122, %s138
      %p140 = scmp.eq.s32.totalorder %s17, 0
      %p141 = por %p139, %p140
      %s142 = ssub.s32 %s18, %s37
      %p143 = scmp.eq.s32.totalorder %s142, 0
      %s145 = sadd.s32 %s144, 1
      %s146 = scalar_select %p143, %s144, %s145
      %p149 = pneg %p143
      %p150 = scmp.eq.s32.totalorder %s11, 1
      %p151 = por %p149, %p150
      %p152 = scmp.ne.s32.totalorder %s144, %s147
      %p153 = scmp.eq.s32.totalorder %s11, 0
      %p154 = por %p152, %p153
      %p155 = scmp.ne.s32.totalorder %s144, %s147
      %p156 = scmp.eq.s32.totalorder %s16, 1
      %p157 = por %p155, %p156
      %p158 = scmp.ne.s32.totalorder %s147, %s148
      %p159 = scmp.eq.s32.totalorder %s16, 0
      %p160 = por %p158, %p159
      %p161 = scmp.ne.s32.totalorder %s147, %s148
      %p162 = scmp.eq.s32.totalorder %s17, 1
      %p163 = por %p161, %p162
      %p165 = scmp.ne.s32.totalorder %s148, %s164
      %p166 = scmp.eq.s32.totalorder %s17, 0
      %p167 = por %p165, %p166
      %p168 = scmp.le.s32.totalorder 1, %s11
      %p169 = scmp.lt.s32.totalorder %s11, 3
      %p170 = pnand %p168, %p169
      %p171 = pneg %p170
      // Predicated region
      $region9: #{tpu_custom_call.1} parent=5 // pred_check
        _
      $region10: #{tpu_custom_call.1} parent=5 // pred_check_branch
        %173 = sbr.rel (%p170) target = $region12
      $region11: #{tpu_custom_call.1} parent=5 // pred_region
        %s174 = ssub.s32 %s11, 1
        // Predicated region
        $region13: #{tpu_custom_call.1} parent=11 // pred_check
          %p175 = pneg %p56
        $region14: #{tpu_custom_call.1} parent=11 // pred_check_branch
          %177 = sbr.rel (%p175) target = $region16
        $region15: #{tpu_custom_call.1} parent=11 // pred_region
          %p178 = scmp.lt.s32.totalorder %s21, 0
          %s179 = scalar_select %p178, %s21, 0
          %s180 = smul.addr %s179, 8
          %s181 = scalar_lea.vmem %s0, %s180
        $region16: #{tpu_custom_call.1} parent=11 // pred_fallthru
          _
        // Predicated region
        $region17: #{tpu_custom_call.1} parent=11 // pred_check
          %p182 = pneg %p82
        $region18: #{tpu_custom_call.1} parent=11 // pred_check_branch
          %184 = sbr.rel (%p182) target = $region20
        $region19: #{tpu_custom_call.1} parent=11 // pred_region
          %p185 = scmp.lt.s32.totalorder %s23, 0
          %s186 = scalar_select %p185, %s23, 0
          %s187 = smul.addr %s186, 8
          %s188 = scalar_lea.vmem %s1, %s187
        $region20: #{tpu_custom_call.1} parent=11 // pred_fallthru
          _
        // Predicated region
        $region21: #{tpu_custom_call.1} parent=11 // pred_check
          %p189 = pneg %p108
        $region22: #{tpu_custom_call.1} parent=11 // pred_check_branch
          %191 = sbr.rel (%p189) target = $region24
        $region23: #{tpu_custom_call.1} parent=11 // pred_region
          %p192 = scmp.lt.s32.totalorder %s21, 0
          %s193 = scalar_select %p192, %s21, 0
          %s194 = smul.addr %s193, 8
          %s195 = scalar_lea.vmem %s2, %s194
        $region24: #{tpu_custom_call.1} parent=11 // pred_fallthru
          _
        // Predicated region
        $region25: #{tpu_custom_call.1} parent=11 // pred_check
          %p196 = pneg %p134
        $region26: #{tpu_custom_call.1} parent=11 // pred_check_branch
          %198 = sbr.rel (%p196) target = $region28
        $region27: #{tpu_custom_call.1} parent=11 // pred_region
          %p199 = scmp.lt.s32.totalorder %s23, 0
          %s200 = scalar_select %p199, %s23, 0
          %s201 = scalar_lea.vmem %s3, %s200
        $region28: #{tpu_custom_call.1} parent=11 // pred_fallthru
          _
      $region12: #{tpu_custom_call.1} parent=5 // pred_fallthru
        _
      %p202 = scmp.lt.s32.totalorder %s11, 2
      // Predicated region
      $region29: #{tpu_custom_call.1} parent=5 // pred_check
        %p203 = pneg %p202
      $region30: #{tpu_custom_call.1} parent=5 // pred_check_branch
        %205 = sbr.rel (%p203) target = $region32
      $region31: #{tpu_custom_call.1} parent=5 // pred_region
        _
      $region32: #{tpu_custom_call.1} parent=5 // pred_fallthru
        _
      %p206 = scmp.le.s32.totalorder 1, %s11
      %p207 = scmp.lt.s32.totalorder %s11, 3
      %p208 = pnand %p206, %p207
      %p209 = pneg %p208
      // Predicated region
      $region33: #{tpu_custom_call.1} parent=5 // pred_check
        _
      $region34: #{tpu_custom_call.1} parent=5 // pred_check_branch
        %211 = sbr.rel (%p208) target = $region36
      $region35: #{tpu_custom_call.1} parent=5 // pred_region
        %s212 = ssub.s32 %s11, 1
        %p213 = scmp.lt.s32.totalorder %s21, 0
        %s214 = scalar_select %p213, %s21, 0
        %s215 = smul.addr %s214, 8
        %s216 = scalar_lea.vmem %s0, %s215
        %p217 = pneg %p56
        %p218 = pneg %p53
        %p219 = scmp.lt.s32.totalorder %s23, 0
        %s220 = scalar_select %p219, %s23, 0
        %s221 = smul.addr %s220, 8
        %s222 = scalar_lea.vmem %s1, %s221
        %p223 = pneg %p82
        %p224 = pneg %p79
        %p225 = scmp.lt.s32.totalorder %s21, 0
        %s226 = scalar_select %p225, %s21, 0
        %s227 = smul.addr %s226, 8
        %s228 = scalar_lea.vmem %s2, %s227
        %p229 = pneg %p108
        %p230 = pneg %p105
        %p231 = scmp.lt.s32.totalorder %s23, 0
        %s232 = scalar_select %p231, %s23, 0
        %s233 = scalar_lea.vmem %s3, %s232
        %p234 = pneg %p134
        %p235 = pneg %p131
        %p236 = pneg %p160
        %p237 = pneg %p157
        %p238 = scmp.lt.s32.totalorder %s21, 0
        %s239 = scalar_select %p238, %s21, 0
        %s240 = smul.addr %s239, 8
        %s241 = scalar_lea.vmem %s0, %s240
        %p242 = scmp.lt.s32.totalorder %s23, 0
        %s243 = scalar_select %p242, %s23, 0
        %s244 = smul.addr %s243, 8
        %s245 = scalar_lea.vmem %s1, %s244
        %p246 = scmp.lt.s32.totalorder %s21, 0
        %s247 = scalar_select %p246, %s21, 0
        %s248 = smul.addr %s247, 8
        %s249 = scalar_lea.vmem %s2, %s248
        %p250 = scmp.lt.s32.totalorder %s23, 0
        %s251 = scalar_select %p250, %s23, 0
        %s252 = scalar_lea.vmem %s3, %s251
        %p253 = scmp.eq.s32.totalorder %s22, 0
        %p254 = scmp.eq.s32.totalorder %s23, 0
        %p255 = pnand %p253, %p254
        %p256 = pneg %p255
        // Predicated region
        $region37: #{tpu_custom_call.1} parent=35 // pred_check
          _
        $region38: #{tpu_custom_call.1} parent=35 // pred_check_branch
          %258 = sbr.rel (%p255) target = $region40
        $region39: #{tpu_custom_call.1} parent=35 // pred_region
          %vm259 = vcmask 7168
          %260 = vst.msk [vmem:[#allocation2] sm:$0xff] %vm259, 1e+30
          %261 = vst.msk [vmem:[#allocation3] sm:$0xff] %vm259, 0.0
          %262 = vst.msk [vmem:[#allocation4] sm:$0xff] %vm259, 0.0
          %263 = vst [vmem:[#allocation5] sm:$0xff] 0.0
        $region40: #{tpu_custom_call.1} parent=35 // pred_fallthru
          _
        %v264 = vld [vmem:[%s241] sm:$0xff]
        %v265 = vld [vmem:[%s245] sm:$0xff]
        %v266 = vld [vmem:[%s245 + $0x8] sm:$0xff]
        %v267 = vld [vmem:[%s245 + $0x10] sm:$0xff]
        %v268 = vld [vmem:[%s245 + $0x18] sm:$0xff]
        %v269 = vld [vmem:[%s249] sm:$0xff]
        %v270 = vld [vmem:[%s252] sm:$0x1]
        %vm271 = vcmask 261120
        %v273 = vsel %vm271, %v264, 0
        %275 = vmatprep.subr.mxu0 0.0
        %276 = vmatpush1.msra.mxu0 %v265
        %277 = vmatprep.subr.mxu0 0.0
        %278 = vmatpush1.msra.mxu0 %v266
        %279 = vmatprep.subr.mxu0 0.0
        %280 = vmatpush1.msra.mxu0 %v267
        %281 = vmatprep.subr.mxu0 0.0
        %282 = vmatpush1.msra.mxu0 %v268
        %283 = vmatprep.subr.mxu0 0.0
        %284 = vmatpush1.msra.mxu0 0.0
        %285 = vmatprep.subr.mxu0 0.0
        %286 = vmatpush1.msra.mxu0 0.0
        %287 = vmatprep.subr.mxu0 0.0
        %288 = vmatpush1.msra.mxu0 0.0
        %289 = vmatprep.subr.mxu0 0.0
        %290 = vmatpush1.msra.mxu0 0.0
        %291 = vmatprep.subr.mxu0 0.0
        %292 = vmatpush1.msra.mxu0 0.0
        %293 = vmatprep.subr.mxu0 0.0
        %294 = vmatpush1.msra.mxu0 0.0
        %295 = vmatprep.subr.mxu0 0.0
        %296 = vmatpush1.msra.mxu0 0.0
        %297 = vmatprep.subr.mxu0 0.0
        %298 = vmatpush1.msra.mxu0 0.0
        %299 = vmatprep.subr.mxu0 0.0
        %300 = vmatpush1.msra.mxu0 0.0
        %301 = vmatprep.subr.mxu0 0.0
        %302 = vmatpush1.msra.mxu0 0.0
        %303 = vmatprep.subr.mxu0 0.0
        %304 = vmatpush1.msra.mxu0 0.0
        %305 = vmatprep.subr.mxu0 0.0
        %306 = vmatpush1.msra.mxu0 0.0
        %307 = vmatprep.subr.mxu0 0.0
        %308 = vmatpush1.msra.mxu0 0.0
        %309 = vmatprep.subr.mxu0 0.0
        %310 = vmatpush1.msra.mxu0 0.0
        %311 = vmatprep.subr.mxu0 0.0
        %312 = vmatpush1.msra.mxu0 0.0
        %313 = vmatprep.subr.mxu0 0.0
        %314 = vmatpush1.msra.mxu0 0.0
        %315 = vmatprep.subr.mxu0 0.0
        %316 = vmatpush1.msra.mxu0 0.0
        %317 = vmatprep.subr.mxu0 0.0
        %318 = vmatpush1.msra.mxu0 0.0
        %319 = vmatprep.subr.mxu0 0.0
        %320 = vmatpush1.msra.mxu0 0.0
        %321 = vmatprep.subr.mxu0 0.0
        %322 = vmatpush1.msra.mxu0 0.0
        %323 = vmatprep.subr.mxu0 0.0
        %324 = vmatpush1.msra.mxu0 0.0
        %325 = vmatprep.subr.mxu0 0.0
        %326 = vmatpush1.msra.mxu0 0.0
        %327 = vmatprep.subr.mxu0 0.0
        %328 = vmatpush1.msra.mxu0 0.0
        %329 = vmatprep.subr.mxu0 0.0
        %330 = vmatpush1.msra.mxu0 0.0
        %331 = vmatprep.subr.mxu0 0.0
        %332 = vmatpush1.msra.mxu0 0.0
        %333 = vmatprep.subr.mxu0 0.0
        %334 = vmatpush1.msra.mxu0 0.0
        %335 = vmatprep.subr.mxu0 0.0
        %336 = vmatpush1.msra.mxu0 0.0
        %337 = vmatprep.subr.mxu0 0.0
        %338 = vmatpush1.msra.mxu0 0.0
        %339 = vmatprep.mubr.f32.mxu0 0.0
        %340 = vmatmul.mubr.f32.gmra.mrb[0].mxu0 %v273
        %v341 = vpop.f32.mrb[0].mxu0
        %v342 = vadd.f32 0.0, %v341
        %v343 = vpop.f32.mrb[0].mxu0
        %344 = vdwg.mxu0
        %s345 = smul.u32 %s23, 8
        %v346 = vlaneseq
        %v347 = vand.u32 %v346, 127
        %v348 = vstv %s345
        %v349 = vadd.s32 %v348, %v347
        %vm350 = vcmp.lt.s32.totalorder %v349, 8
        %351 = vset.pattern.permute.xlu0 0
        %352 = vperm.xlu0 %351, %v269
        %v353 = vpop.permute.xlu0 %352
        %v354 = vlaneseq
        %v355 = vshrl.u32 %v354, 7
        %v356 = vsub.s32 0, %v355
        %v357 = vrot.slane %v270, %v356
        %vm358 = vcmp.eq.s32.totalorder %v353, %v357
        %v359 = vsel %vm350, 1, 0
        %vm360 = vcmp.eq.s32.totalorder %v359, 1
        %vm361 = vmand %vm358, %vm360
        %vm362 = vcmp.lt.f32.partialorder %v342, 0.9
        %vm363 = vmand %vm361, %vm362
        // Predicated region
        $region41: #{tpu_custom_call.1} parent=35 // pred_check
          %p364 = pneg %p253
        $region42: #{tpu_custom_call.1} parent=35 // pred_check_branch
          %366 = sbr.rel (%p364) target = $region44
        $region43: #{tpu_custom_call.1} parent=35 // pred_region
          %v367 = vsel %vm363, %v342, 1e+30
          %vm368 = vcmask 64512
          %v369 = vsel %vm368, %v367, inf
          %370 = vmin.xlane.f32.xlu0 %v369
          %v371 = vpop.xlane.xlu0 %370
          %v372 = vld [vmem:[#allocation2] sm:$0xff]
          %v373 = vmin.f32 %v372, %v371
          %vm374 = vcmask 7168
          %375 = vst.msk [vmem:[#allocation2] sm:$0xff] %vm374, %v373
        $region44: #{tpu_custom_call.1} parent=35 // pred_fallthru
          _
        %p376 = scmp.eq.s32.totalorder %s22, 1
        // Predicated region
        $region45: #{tpu_custom_call.1} parent=35 // pred_check
          %p377 = pneg %p376
        $region46: #{tpu_custom_call.1} parent=35 // pred_check_branch
          %379 = sbr.rel (%p377) target = $region48
        $region47: #{tpu_custom_call.1} parent=35 // pred_region
          %vm380 = vcmp.ne.s32.totalorder %v353, %v357
          %vm381 = vmand %vm380, %vm360
          %v382 = vadd.f32 %v342, 0.5
          %v383 = vld [vmem:[#allocation2] sm:$0xff]
          %385 = vset.pattern.permute.xlu0 0
          %386 = vperm.xlu0 %385, %v383
          %v387 = vpop.permute.xlu0 %386
          %vm389 = vcmp.gt.f32.partialorder %v382, %v387
          %vm390 = vmand %vm381, %vm389
          %vm391 = vcmp.gt.f32.partialorder %v342, 0.1
          %vm392 = vmand %vm390, %vm391
          %v393 = vmul.f32 %v342, %v342
          %v394 = vmul.f32 %v342, -3.8
          %v395 = vadd.f32 %v393, %v394
          %v396 = vadd.f32 %v395, 1.81
          %v397 = vmul.f32 %v342, 49.8
          %v398 = vadd.f32 %v393, %v397
          %v399 = vadd.f32 %v398, -24.99
          %v400 = vsel %vm392, %v399, -1e+30
          %v401 = vsel %vm363, %v396, %v400
          %v402 = vmul.f32 %v401, 1.442695
          %v403 = vpow.pop %v402
          %v404 = vld [vmem:[#allocation3] sm:$0xff]
          %v405 = vsel %vm363, %v403, 0.0
          %vm406 = vcmask 64512
          %v407 = vsel %vm406, %v405, 0.0
          %408 = vadd.xlane.f32.xlu0 %v407
          %v409 = vpop.xlane.xlu0 %408
          %v410 = vadd.f32 %v404, %v409
          %vm411 = vcmask 7168
          %412 = vst.msk [vmem:[#allocation3] sm:$0xff] %vm411, %v410
          %v413 = vld [vmem:[#allocation4] sm:$0xff]
          %v414 = vsel %vm392, %v403, 0.0
          %v415 = vsel %vm406, %v414, 0.0
          %416 = vadd.xlane.f32.xlu0 %v415
          %v417 = vpop.xlane.xlu0 %416
          %v418 = vadd.f32 %v413, %v417
          %419 = vst.msk [vmem:[#allocation4] sm:$0xff] %vm411, %v418
          %v420 = vlaneseq
          %v421 = vshrl.u32 %v420, 7
          %p422 = scmp.eq.s32.totalorder %s21, 0
          // Predicated region
          $region49: #{tpu_custom_call.1} parent=47 // pred_check
            %p423 = pneg %p422
          $region50: #{tpu_custom_call.1} parent=47 // pred_check_branch
            %425 = sbr.rel (%p423) target = $region52
          $region51: #{tpu_custom_call.1} parent=47 // pred_region
            %vm426 = vcmp.eq.s32.totalorder %v347, 2
            %v427 = vsel %vm363, %v342, 0.0
            %v429 = vrot.slane %v427, 7
            %vm431 = vcmask 57344
            %v432 = vsel %vm431, %v429, 0.0
            %433 = vadd.xlane.f32.xlu0 %v432
            %v434 = vpop.xlane.xlu0 %433
            %v435 = vrot.slane %v434, 4
            %v436 = vadd.f32 %v434, %v435
            %v437 = vrot.slane %v436, 2
            %v438 = vadd.f32 %v436, %v437
            %v439 = vrot.slane %v438, 1
            %v440 = vadd.f32 %v438, %v439
            %s441 = vtos %v440
            %v442 = vstv %s441
            %v443 = vsel %vm426, %v442, 0.0
            %vm444 = vcmp.eq.s32.totalorder %v347, 3
            %v445 = vsel %vm363, 1, 0
            %v446 = vcvt.s32.f32 %v445
            %v448 = vrot.slane %v446, 7
            %v450 = vsel %vm431, %v448, 0.0
            %451 = vadd.xlane.f32.xlu0 %v450
            %v452 = vpop.xlane.xlu0 %451
            %v453 = vrot.slane %v452, 4
            %v454 = vadd.f32 %v452, %v453
            %v455 = vrot.slane %v454, 2
            %v456 = vadd.f32 %v454, %v455
            %v457 = vrot.slane %v456, 1
            %v458 = vadd.f32 %v456, %v457
            %s459 = vtos %v458
            %v460 = vstv %s459
            %v461 = vsel %vm444, %v460, 0.0
            %v462 = vadd.f32 %v443, %v461
            %vm463 = vcmp.eq.s32.totalorder %v347, 4
            %v464 = vsel %vm392, %v342, 0.0
            %v466 = vrot.slane %v464, 7
            %v468 = vsel %vm431, %v466, 0.0
            %469 = vadd.xlane.f32.xlu0 %v468
            %v470 = vpop.xlane.xlu0 %469
            %v471 = vrot.slane %v470, 4
            %v472 = vadd.f32 %v470, %v471
            %v473 = vrot.slane %v472, 2
            %v474 = vadd.f32 %v472, %v473
            %v475 = vrot.slane %v474, 1
            %v476 = vadd.f32 %v474, %v475
            %s477 = vtos %v476
            %v478 = vstv %s477
            %v479 = vsel %vm463, %v478, 0.0
            %v480 = vadd.f32 %v462, %v479
            %vm481 = vcmp.eq.s32.totalorder %v347, 5
            %v482 = vsel %vm392, 1, 0
            %v483 = vcvt.s32.f32 %v482
            %v485 = vrot.slane %v483, 7
            %v487 = vsel %vm431, %v485, 0.0
            %488 = vadd.xlane.f32.xlu0 %v487
            %v489 = vpop.xlane.xlu0 %488
            %v490 = vrot.slane %v489, 4
            %v491 = vadd.f32 %v489, %v490
            %v492 = vrot.slane %v491, 2
            %v493 = vadd.f32 %v491, %v492
            %v494 = vrot.slane %v493, 1
            %v495 = vadd.f32 %v493, %v494
            %s496 = vtos %v495
            %v497 = vstv %s496
            %v498 = vsel %vm481, %v497, 0.0
            %v499 = vadd.f32 %v480, %v498
            %v500 = vld [vmem:[#allocation5] sm:$0xff]
            %vm501 = vcmp.eq.s32.totalorder %v421, 0
            %v502 = vsel %vm501, %v499, 0.0
            %v503 = vadd.f32 %v500, %v502
            %504 = vst [vmem:[#allocation5] sm:$0xff] %v503
          $region52: #{tpu_custom_call.1} parent=47 // pred_fallthru
            _
          // Predicated region
          $region53: #{tpu_custom_call.1} parent=47 // pred_check
            %p505 = pneg %p254
          $region54: #{tpu_custom_call.1} parent=47 // pred_check_branch
            %507 = sbr.rel (%p505) target = $region56
          $region55: #{tpu_custom_call.1} parent=47 // pred_region
            %s508 = smul.u32 %s21, 8
            %v509 = vstv %s508
            %v510 = vadd.s32 %v509, %v421
            %vm511 = vcmp.lt.s32.totalorder %v510, 8
            %v512 = vld [vmem:[#allocation4] sm:$0xff]
            %vm513 = vcmp.gt.f32.partialorder %v512, 0.0
            %v514 = vld [vmem:[#allocation3] sm:$0xff]
            %v515 = vadd.f32 %v514, 1.0
            %v516 = vlog2.pop %v515
            %v517 = vmul.f32 %v516, 0.6931472
            %v518 = vmul.f32 %v517, 0.5
            %v519 = vadd.f32 %v512, 1.0
            %v520 = vlog2.pop %v519
            %v521 = vmul.f32 %v520, 0.6931472
            %v522 = vmul.f32 %v521, 0.02
            %vm523 = vmand %vm513, %vm511
            %v524 = vadd.f32 %v518, %v522
            %v525 = vsel %vm523, %v524, 0.0
            %v526 = vsel %vm411, %v525, 0.0
            %527 = vadd.xlane.f32.xlu0 %v526
            %v528 = vpop.xlane.xlu0 %527
            %v529 = vrot.slane %v528, 4
            %v530 = vadd.f32 %v528, %v529
            %v531 = vrot.slane %v530, 2
            %v532 = vadd.f32 %v530, %v531
            %v533 = vrot.slane %v532, 1
            %v534 = vadd.f32 %v532, %v533
            %s535 = vtos %v534
            %vm536 = vmxor %vm513, 1
            %vm537 = vmand %vm511, %vm536
            %v538 = vsel %vm537, 1.0, 0.0
            %v539 = vsel %vm411, %v538, 0.0
            %540 = vadd.xlane.f32.xlu0 %v539
            %v541 = vpop.xlane.xlu0 %540
            %v542 = vrot.slane %v541, 4
            %v543 = vadd.f32 %v541, %v542
            %v544 = vrot.slane %v543, 2
            %v545 = vadd.f32 %v543, %v544
            %v546 = vrot.slane %v545, 1
            %v547 = vadd.f32 %v545, %v546
            %s548 = vtos %v547
            %vm549 = vcmp.eq.s32.totalorder %v347, 0
            %v550 = vstv %s535
            %v551 = vsel %vm549, %v550, 0.0
            %vm552 = vcmp.eq.s32.totalorder %v347, 1
            %v553 = vstv %s548
            %v554 = vsel %vm552, %v553, 0.0
            %v555 = vadd.f32 %v551, %v554
            %v556 = vld [vmem:[#allocation5] sm:$0xff]
            %vm557 = vcmp.eq.s32.totalorder %v421, 0
            %v558 = vsel %vm557, %v555, 0.0
            %v559 = vadd.f32 %v556, %v558
            %560 = vst [vmem:[#allocation5] sm:$0xff] %v559
          $region56: #{tpu_custom_call.1} parent=47 // pred_fallthru
            _
        $region48: #{tpu_custom_call.1} parent=35 // pred_fallthru
          _
        // Predicated region
        $region57: #{tpu_custom_call.1} parent=35 // pred_check
          %p561 = pneg %p157
        $region58: #{tpu_custom_call.1} parent=35 // pred_check_branch
          %563 = sbr.rel (%p561) target = $region60
        $region59: #{tpu_custom_call.1} parent=35 // pred_region
          %s565 = ssub.s32 128, 128
          %566 = vsyncadd [#allocation6], %s565
          %s567 = smul.addr %s21, 128
          %s568 = scalar_lea.hbm %s4, %s567
          %s570 = sshll.u32 [#allocation5], 4
          %s571 = int_to_ptr.vmem [resolvable:$true] %s570
          %573 = dma.vmem_to_hbm [thread:$0]  %s571, 128, %s568, [#allocation6]
        $region60: #{tpu_custom_call.1} parent=35 // pred_fallthru
          _
        // Predicated region
        $region61: #{tpu_custom_call.1} parent=35 // pred_check
          %p574 = pneg %p157
        $region62: #{tpu_custom_call.1} parent=35 // pred_check_branch
          %576 = sbr.rel (%p574) target = $region64
        $region63: #{tpu_custom_call.1} parent=35 // pred_region
          %577 = dma.done [#allocation6], 128
        $region64: #{tpu_custom_call.1} parent=35 // pred_fallthru
          _
      $region36: #{tpu_custom_call.1} parent=5 // pred_fallthru
        _
      %p578 = scmp.le.s32.totalorder 2, %s11
      // Predicated region
      $region65: #{tpu_custom_call.1} parent=5 // pred_check
        %p579 = pneg %p578
      $region66: #{tpu_custom_call.1} parent=5 // pred_check_branch
        %581 = sbr.rel (%p579) target = $region68
      $region67: #{tpu_custom_call.1} parent=5 // pred_region
        %s582 = ssub.s32 %s11, 2
      $region68: #{tpu_custom_call.1} parent=5 // pred_fallthru
        _
    $region6: #{tpu_custom_call.1} parent=1 // loop_footer
      %s15 = sadd.s32 1, %s11
    $region7: #{tpu_custom_call.1} parent=1 // loop_footer_branch
      %10 = sbr.rel target = $region3
    $region8: #{tpu_custom_call.1} parent=1 // loop_exit
      _
    %583 = vsyncpa [#allocation6], 1
    %s584 = scalar_lea.sflag [#allocation6], 1
    %585 = vsyncpa %s584, 1

</llo_original>
